<compile_context>
chip_gen: v7x
topology: tpu7x:2x2x1
jax: 0.10.0
libtpu: 0.0.40
codegen_flags: <defaults>
</compile_context>

<pallas_src>
import functools

import jax
import jax.numpy as jnp
from jax.experimental import pallas as pl
from jax.experimental.pallas import tpu as pltpu


def _round_up(n, m):
    return ((n + m - 1) // m) * m


def _choose_k_tile(m, target=512):
    """K-tile for the fc1 grid: multiple of 128 dividing m, else the full m."""
    if m <= target:
        return m
    for tk in range(target, 127, -128):
        if m % tk == 0:
            return tk
    return m


def prepare_discriminator_params(params, minibatch_features, minibatch_kernel_dim):
    """One-time parameter prep (hoisted out of the per-call forward).

    Returns bf16 halves of w1 plus a single lane-dense f32 slab holding every
    other parameter, with 8-row-aligned section offsets.
    """
    w1, b1, w2, b2, w3, b3, T, wv, bv = params
    two_m, F1 = w1.shape
    M = two_m // 2
    F2 = int(w2.shape[1])
    F3 = int(w3.shape[1])
    OUT, K = minibatch_features, minibatch_kernel_dim
    OUTK = OUT * K

    # Lane-dense slab width and the 8-aligned minibatch-feature width.
    PADW = _round_up(max(F1, F2, F3, OUTK + 1, OUT, 1), 128)
    MP = _round_up(OUTK, 8)

    # [T.view(F3, OUT*K) | wv_x]: folds the h3 part of the validity layer into
    # the matmul that produces the minibatch matrices.  wv_m pairs with o_b.
    t2 = T.reshape(F3, OUTK)
    tvx = jnp.concatenate([t2, wv[:F3, :]], axis=1)          # [F3, OUTK + 1]
    wv_m = wv[F3:, :]                                         # [OUT, 1]

    # Constant group-indicator matrix G[o*K + k, o] = 1 (sums |.| over k).
    g = (jnp.arange(OUTK)[:, None] // K ==
         jnp.arange(OUT)[None, :]).astype(jnp.float32)        # [OUTK, OUT]

    # (name, array, stored_rows) -- stored_rows is the row count the kernel
    # slices (>= array rows); extra rows / lanes are zero and inert.
    sections = [
        ("b1",  b1.reshape(1, F1),  1),
        ("w2",  w2,                 F1),     # h1 is F1 wide
        ("b2",  b2.reshape(1, F2),  1),
        ("w3",  w3,                 PADW),   # h2 is PADW wide
        ("b3",  b3.reshape(1, F3),  1),
        ("tvx", tvx,                PADW),   # h3 is PADW wide
        ("g",   g,                  MP),     # mats sliced to MP lanes
        ("wvm", wv_m,               PADW),   # o_b is PADW wide
        ("bv",  bv.reshape(1, 1),   1),
    ]
    offs, rows = {}, 0
    for name, _, stored in sections:
        offs[name] = rows
        rows += _round_up(stored, 8)
    slab = jnp.zeros((_round_up(rows, 8), PADW), jnp.float32)
    for name, arr, _ in sections:
        o = offs[name]
        slab = slab.at[o:o + arr.shape[0], :arr.shape[1]].set(
            arr.astype(jnp.float32))

    return dict(
        w1_top=w1[:M].astype(jnp.bfloat16),    # pairs with rating_values
        w1_bot=w1[M:].astype(jnp.bfloat16),    # pairs with existence_flags
        slab=slab,
        offs=offs,
        dims=(F1, F2, F3, OUT, K, PADW, MP),
    )


def _disc_kernel(F1, OUTK, PADW, MP, offs,
                 rv_ref, ef_ref, w1t_ref, w1b_ref, slab_ref, out_ref, acc_ref):
    f32 = jnp.float32
    k = pl.program_id(0)

    @pl.when(k == 0)
    def _():
        acc_ref[...] = jnp.zeros_like(acc_ref)

    # fc1 partial contraction for this K-tile (both input halves).
    acc_ref[...] += (
        jnp.dot(rv_ref[...], w1t_ref[...], preferred_element_type=f32)
        + jnp.dot(ef_ref[...], w1b_ref[...], preferred_element_type=f32))

    @pl.when(k == pl.num_programs(0) - 1)
    def _():
        # Static, 8-row-aligned, full-lane-width slices of the parameter slab.
        b1 = slab_ref[offs["b1"]:offs["b1"] + 1, :F1]
        w2 = slab_ref[offs["w2"]:offs["w2"] + F1, :]
        b2 = slab_ref[offs["b2"]:offs["b2"] + 1, :]
        w3 = slab_ref[offs["w3"]:offs["w3"] + PADW, :]
        b3 = slab_ref[offs["b3"]:offs["b3"] + 1, :]
        tvx = slab_ref[offs["tvx"]:offs["tvx"] + PADW, :]
        g = slab_ref[offs["g"]:offs["g"] + MP, :]
        wvm = slab_ref[offs["wvm"]:offs["wvm"] + PADW, :1]
        bv = slab_ref[offs["bv"]:offs["bv"] + 1, :1]

        # ---- MLP trunk (dropout == identity in eval mode) ----
        h1 = jnp.maximum(acc_ref[...] + b1, 0.0)                         # [B, F1]
        h2 = jnp.maximum(jnp.dot(h1, w2, preferred_element_type=f32) + b2, 0.0)
        h3 = jnp.maximum(jnp.dot(h2, w3, preferred_element_type=f32) + b3, 0.0)

        # One dot yields the minibatch matrices and the h3 part of validity.
        mv = jnp.dot(h3, tvx, preferred_element_type=f32)                # [B, PADW]
        mats = mv[:, :MP]                                                # [B, MP]
        vx = mv[:, OUTK:OUTK + 1]                                        # h3 @ wv_x

        # ---- MinibatchDiscrimination, fully batched ----
        # diff[i*B + j] = |mats[i] - mats[j]|; the dot with G sums over the
        # kernel dim k per output feature.  Columns of mats beyond OUTK (vx /
        # zero pad) hit zero rows of G and contribute nothing.
        B = mats.shape[0]
        diff = jnp.abs(mats[:, None, :] - mats[None, :, :]).reshape(B * B, MP)
        norm = jnp.dot(diff, g, preferred_element_type=f32)              # [B*B, PADW]
        # norm is symmetric in (i, j), so reducing over j matches the
        # reference's reduction over i.  Self term exp(0)=1 removed by the -1;
        # padded columns (norm==0) become B-1 but multiply zero rows of wvm.
        o_b = jnp.sum(jnp.exp(-norm).reshape(B, B, PADW), axis=1) - 1.0  # [B, PADW]

        # ---- validity layer ([h3, o_b] concat folded into two partial dots) ----
        out_ref[...] = vx + jnp.dot(o_b, wvm, preferred_element_type=f32) + bv


def main_discriminator_forward(rating_values, existence_flags, prepared):
    """rating_values / existence_flags: [B, 1, num_movies] (dense)."""
    rv = rating_values[:, 0, :].astype(jnp.bfloat16)   # [B, M], MXU-native dtype
    ef = existence_flags[:, 0, :].astype(jnp.bfloat16)
    B, M = rv.shape

    F1, F2, F3, OUT, K, PADW, MP = prepared["dims"]
    OUTK = OUT * K
    w1_top, w1_bot = prepared["w1_top"], prepared["w1_bot"]
    slab, offs = prepared["slab"], prepared["offs"]
    slab_rows = slab.shape[0]

    tk = _choose_k_tile(M)
    nk = M // tk

    kernel = functools.partial(_disc_kernel, F1, OUTK, PADW, MP, offs)

    flops = (2 * B * (2 * M * F1 + F1 * PADW + 2 * PADW * PADW + PADW)
             + 2 * B * B * MP * PADW + 3 * B * B * MP)
    cost = pl.CostEstimate(
        flops=int(flops),
        transcendentals=int(B * B * PADW),
        bytes_accessed=int(2 * (rv.size + ef.size + w1_top.size + w1_bot.size)
                           + 4 * slab.size + 4 * B),
    )

    return pl.pallas_call(
        kernel,
        out_shape=jax.ShapeDtypeStruct((B, 1), jnp.float32),
        grid_spec=pltpu.PrefetchScalarGridSpec(
            num_scalar_prefetch=0,
            grid=(nk,),
            in_specs=[
                pl.BlockSpec((B, tk), lambda k: (0, k)),       # rating half
                pl.BlockSpec((B, tk), lambda k: (0, k)),       # existence half
                pl.BlockSpec((tk, F1), lambda k: (k, 0)),      # w1[:M] tile
                pl.BlockSpec((tk, F1), lambda k: (k, 0)),      # w1[M:] tile
                pl.BlockSpec((slab_rows, PADW), lambda k: (0, 0)),  # resident slab
            ],
            out_specs=pl.BlockSpec((B, 1), lambda k: (0, 0)),
            scratch_shapes=[pltpu.VMEM((B, F1), jnp.float32)],
        ),
        compiler_params=pltpu.CompilerParams(
            dimension_semantics=("arbitrary",),   # K-axis is a reduction
            vmem_limit_bytes=32 * 1024 * 1024,
        ),
        cost_estimate=cost,
    )(rv, ef, w1_top, w1_bot, slab)


def _reference_forward(rating_values, existence_flags, params,
                       minibatch_features, minibatch_kernel_dim):
    """Pure-JAX reference mirroring the PyTorch forward (eval mode).

    fc1 uses the same bf16 operands as the kernel (f32 accumulation) so the
    comparison isolates kernel correctness rather than bf16 rounding.
    """
    w1, b1, w2, b2, w3, b3, T, wv, bv = params
    rv = rating_values.squeeze(1).astype(jnp.float32)
    ef = existence_flags.squeeze(1).astype(jnp.float32)
    x = jnp.concatenate([rv, ef], axis=1)
    h = jnp.dot(x.astype(jnp.bfloat16), w1.astype(jnp.bfloat16),
                preferred_element_type=jnp.float32) + b1
    h = jax.nn.relu(h)
    h = jax.nn.relu(h @ w2 + b2)
    h = jax.nn.relu(h @ w3 + b3)
    F3 = w3.shape[1]
    mats = (h @ T.reshape(F3, -1)).reshape(-1, minibatch_features,
                                           minibatch_kernel_dim)
    Mb = mats[None]                       # [1, B, OUT, K]
    Mt = jnp.transpose(Mb, (1, 0, 2, 3))  # [B, 1, OUT, K]
    norm = jnp.abs(Mb - Mt).sum(3)
    o_b = jnp.exp(-norm).sum(0) - 1.0
    h = jnp.concatenate([h, o_b], axis=1)
    return h @ wv + bv


if __name__ == "__main__":
    # Small shapes consistent with the module.
    B = 8
    num_movies = 16
    fc1_size, fc2_size, fc3_size = 32, 32, 32
    mb_out, mb_k = 10, 3
    input_size = 2 * num_movies

    key = jax.random.PRNGKey(0)
    ks = jax.random.split(key, 12)

    def linear_init(kw, kb, fan_in, fan_out):
        bound = 1.0 / jnp.sqrt(fan_in)
        w = jax.random.uniform(kw, (fan_in, fan_out), jnp.float32, -bound, bound)
        b = jax.random.uniform(kb, (fan_out,), jnp.float32, -bound, bound)
        return w, b

    w1, b1 = linear_init(ks[0], ks[1], input_size, fc1_size)
    w2, b2 = linear_init(ks[2], ks[3], fc1_size, fc2_size)
    w3, b3 = linear_init(ks[4], ks[5], fc2_size, fc3_size)
    T = jax.random.normal(ks[6], (fc3_size, mb_out, mb_k), jnp.float32)
    wv, bv = linear_init(ks[7], ks[8], fc3_size + mb_out, 1)
    params = (w1, b1, w2, b2, w3, b3, T, wv, bv)

    rating_values = jax.random.uniform(ks[9], (B, 1, num_movies), jnp.float32,
                                       0.0, 5.0)
    existence_flags = (jax.random.uniform(ks[10], (B, 1, num_movies)) > 0.5
                       ).astype(jnp.float32)

    # One-time parameter prep (hoisted out of the steady-state forward).
    prepared = prepare_discriminator_params(params, mb_out, mb_k)
    fwd = jax.jit(lambda r, e: main_discriminator_forward(r, e, prepared))

    out = jax.block_until_ready(fwd(rating_values, existence_flags))

    ref = _reference_forward(rating_values, existence_flags, params, mb_out, mb_k)
    assert out.shape == (B, 1), out.shape
    assert jnp.allclose(out, ref, atol=2e-3, rtol=2e-3), (out, ref)
    print("KERNEL_OK")
</pallas_src>

<mosaic_0001>
module attributes {stable_mosaic.version = 11 : i64} {
  func.func @_disc_kernel(%arg0: i32, %arg1: memref<8x16xbf16, #tpu.memory_space<vmem>>, %arg2: memref<8x16xbf16, #tpu.memory_space<vmem>>, %arg3: memref<16x32xbf16, #tpu.memory_space<vmem>>, %arg4: memref<16x32xbf16, #tpu.memory_space<vmem>>, %arg5: memref<480x128xf32, #tpu.memory_space<vmem>>, %arg6: memref<8x1xf32, #tpu.memory_space<vmem>>, %arg7: memref<8x32xf32, #tpu.memory_space<vmem>>) attributes {dimension_semantics = [#tpu.dimension_semantics<arbitrary>], iteration_bounds = array<i64: 1>, scalar_prefetch = 0 : i64, scratch_operands = 1 : i64, tpu.core_type = #tpu.core_type<tc>, window_params = [{transform_indices = @transform_0, window_bounds = array<i64: 8, 16>}, {transform_indices = @transform_1, window_bounds = array<i64: 8, 16>}, {transform_indices = @transform_2, window_bounds = array<i64: 16, 32>}, {transform_indices = @transform_3, window_bounds = array<i64: 16, 32>}, {pipeline_mode = #tpu.pipeline_mode<synchronous>, transform_indices = @transform_4, window_bounds = array<i64: 480, 128>}, {pipeline_mode = #tpu.pipeline_mode<synchronous>, transform_indices = @transform_5, window_bounds = array<i64: 8, 1>}]} {
    %c0_i32 = arith.constant 0 : i32
    %0 = arith.cmpi eq, %arg0, %c0_i32 : i32
    %1 = arith.extui %0 : i1 to i32
    %c0_i32_0 = arith.constant 0 : i32
    %2 = arith.cmpi ne, %1, %c0_i32_0 : i32
    scf.if %2 {
      %cst_15 = arith.constant 0.000000e+00 : f32
      %16 = vector.broadcast %cst_15 : f32 to vector<8x32xf32>
      %c0_16 = arith.constant 0 : index
      %c0_17 = arith.constant 0 : index
      %17 = vector.load %arg7[%c0_16, %c0_17] : memref<8x32xf32, #tpu.memory_space<vmem>>, vector<8x32xf32>
      tpu.vector_store %arg7[%c0_16, %c0_17], %16 {strides = array<i32>} : memref<8x32xf32, #tpu.memory_space<vmem>>, vector<8x32xf32>,
    } else {
    }
    %c0 = arith.constant 0 : index
    %c0_1 = arith.constant 0 : index
    %3 = vector.load %arg7[%c0, %c0_1] : memref<8x32xf32, #tpu.memory_space<vmem>>, vector<8x32xf32>
    %c0_2 = arith.constant 0 : index
    %c0_3 = arith.constant 0 : index
    %4 = vector.load %arg1[%c0_2, %c0_3] : memref<8x16xbf16, #tpu.memory_space<vmem>>, vector<8x16xbf16>
    %c0_4 = arith.constant 0 : index
    %c0_5 = arith.constant 0 : index
    %5 = vector.load %arg3[%c0_4, %c0_5] : memref<16x32xbf16, #tpu.memory_space<vmem>>, vector<16x32xbf16>
    %cst = arith.constant dense<0.000000e+00> : vector<8x32xf32>
    %6 = tpu.matmul %4, %5, %cst {dimension_numbers = #tpu.dot_dimension_numbers<[1], [0], [0], [1], [0, 0, 1, 1], [], []>} : vector<8x16xbf16>, vector<16x32xbf16>, vector<8x32xf32> -> vector<8x32xf32>
    %c0_6 = arith.constant 0 : index
    %c0_7 = arith.constant 0 : index
    %7 = vector.load %arg2[%c0_6, %c0_7] : memref<8x16xbf16, #tpu.memory_space<vmem>>, vector<8x16xbf16>
    %c0_8 = arith.constant 0 : index
    %c0_9 = arith.constant 0 : index
    %8 = vector.load %arg4[%c0_8, %c0_9] : memref<16x32xbf16, #tpu.memory_space<vmem>>, vector<16x32xbf16>
    %cst_10 = arith.constant dense<0.000000e+00> : vector<8x32xf32>
    %9 = tpu.matmul %7, %8, %cst_10 {dimension_numbers = #tpu.dot_dimension_numbers<[1], [0], [0], [1], [0, 0, 1, 1], [], []>} : vector<8x16xbf16>, vector<16x32xbf16>, vector<8x32xf32> -> vector<8x32xf32>
    %10 = arith.addf %6, %9 : vector<8x32xf32>
    %11 = arith.addf %3, %10 : vector<8x32xf32>
    %c0_11 = arith.constant 0 : index
    %c0_12 = arith.constant 0 : index
    %12 = vector.load %arg7[%c0_11, %c0_12] : memref<8x32xf32, #tpu.memory_space<vmem>>, vector<8x32xf32>
    tpu.vector_store %arg7[%c0_11, %c0_12], %11 {strides = array<i32>} : memref<8x32xf32, #tpu.memory_space<vmem>>, vector<8x32xf32>,
    %c0_i32_13 = arith.constant 0 : i32
    %13 = arith.cmpi eq, %arg0, %c0_i32_13 : i32
    %14 = arith.extui %13 : i1 to i32
    %c0_i32_14 = arith.constant 0 : i32
    %15 = arith.cmpi ne, %14, %c0_i32_14 : i32
    scf.if %15 {
      %c0_15 = arith.constant 0 : index
      %c0_16 = arith.constant 0 : index
      %16 = vector.load %arg5[%c0_15, %c0_16] : memref<480x128xf32, #tpu.memory_space<vmem>>, vector<1x32xf32>
      %c8 = arith.constant 8 : index
      %c0_17 = arith.constant 0 : index
      %17 = vector.load %arg5[%c8, %c0_17] : memref<480x128xf32, #tpu.memory_space<vmem>>, vector<32x128xf32>
      %c40 = arith.constant 40 : index
      %c0_18 = arith.constant 0 : index
      %18 = vector.load %arg5[%c40, %c0_18] : memref<480x128xf32, #tpu.memory_space<vmem>>, vector<1x128xf32>
      %c48 = arith.constant 48 : index
      %c0_19 = arith.constant 0 : index
      %19 = vector.load %arg5[%c48, %c0_19] : memref<480x128xf32, #tpu.memory_space<vmem>>, vector<128x128xf32>
      %c176 = arith.constant 176 : index
      %c0_20 = arith.constant 0 : index
      %20 = vector.load %arg5[%c176, %c0_20] : memref<480x128xf32, #tpu.memory_space<vmem>>, vector<1x128xf32>
      %c184 = arith.constant 184 : index
      %c0_21 = arith.constant 0 : index
      %21 = vector.load %arg5[%c184, %c0_21] : memref<480x128xf32, #tpu.memory_space<vmem>>, vector<128x128xf32>
      %c312 = arith.constant 312 : index
      %c0_22 = arith.constant 0 : index
      %22 = vector.load %arg5[%c312, %c0_22] : memref<480x128xf32, #tpu.memory_space<vmem>>, vector<32x128xf32>
      %c344 = arith.constant 344 : index
      %c0_23 = arith.constant 0 : index
      %23 = vector.load %arg5[%c344, %c0_23] : memref<480x128xf32, #tpu.memory_space<vmem>>, vector<128x1xf32>
      %c472 = arith.constant 472 : index
      %c0_24 = arith.constant 0 : index
      %24 = vector.load %arg5[%c472, %c0_24] : memref<480x128xf32, #tpu.memory_space<vmem>>, vector<1x1xf32>
      %c0_25 = arith.constant 0 : index
      %c0_26 = arith.constant 0 : index
      %25 = vector.load %arg7[%c0_25, %c0_26] : memref<8x32xf32, #tpu.memory_space<vmem>>, vector<8x32xf32>
      %26 = vector.broadcast %16 : vector<1x32xf32> to vector<8x32xf32>
      %27 = arith.addf %25, %26 : vector<8x32xf32>
      %cst_27 = arith.constant 0.000000e+00 : f32
      %28 = vector.broadcast %cst_27 : f32 to vector<8x32xf32>
      %29 = arith.maximumf %27, %28 : vector<8x32xf32>
      %cst_28 = arith.constant dense<0.000000e+00> : vector<8x128xf32>
      %30 = tpu.matmul %29, %17, %cst_28 {dimension_numbers = #tpu.dot_dimension_numbers<[1], [0], [0], [1], [0, 0, 1, 1], [], []>} : vector<8x32xf32>, vector<32x128xf32>, vector<8x128xf32> -> vector<8x128xf32>
      %31 = vector.broadcast %18 : vector<1x128xf32> to vector<8x128xf32>
      %32 = arith.addf %30, %31 : vector<8x128xf32>
      %cst_29 = arith.constant 0.000000e+00 : f32
      %33 = vector.broadcast %cst_29 : f32 to vector<8x128xf32>
      %34 = arith.maximumf %32, %33 : vector<8x128xf32>
      %cst_30 = arith.constant dense<0.000000e+00> : vector<8x128xf32>
      %35 = tpu.matmul %34, %19, %cst_30 {dimension_numbers = #tpu.dot_dimension_numbers<[1], [0], [0], [1], [0, 0, 1, 1], [], []>} : vector<8x128xf32>, vector<128x128xf32>, vector<8x128xf32> -> vector<8x128xf32>
      %36 = vector.broadcast %20 : vector<1x128xf32> to vector<8x128xf32>
      %37 = arith.addf %35, %36 : vector<8x128xf32>
      %cst_31 = arith.constant 0.000000e+00 : f32
      %38 = vector.broadcast %cst_31 : f32 to vector<8x128xf32>
      %39 = arith.maximumf %37, %38 : vector<8x128xf32>
      %cst_32 = arith.constant dense<0.000000e+00> : vector<8x128xf32>
      %40 = tpu.matmul %39, %21, %cst_32 {dimension_numbers = #tpu.dot_dimension_numbers<[1], [0], [0], [1], [0, 0, 1, 1], [], []>} : vector<8x128xf32>, vector<128x128xf32>, vector<8x128xf32> -> vector<8x128xf32>
      %41 = vector.extract_strided_slice %40 {offsets = [0, 0], sizes = [8, 32], strides = [1, 1]} : vector<8x128xf32> to vector<8x32xf32>
      %42 = vector.extract_strided_slice %40 {offsets = [0, 30], sizes = [8, 1], strides = [1, 1]} : vector<8x128xf32> to vector<8x1xf32>
      %43 = vector.shape_cast %41 : vector<8x32xf32> to vector<8x1x32xf32>
      %44 = vector.shape_cast %41 : vector<8x32xf32> to vector<1x8x32xf32>
      %45 = vector.broadcast %43 : vector<8x1x32xf32> to vector<8x8x32xf32>
      %46 = vector.broadcast %44 : vector<1x8x32xf32> to vector<8x8x32xf32>
      %47 = arith.subf %45, %46 : vector<8x8x32xf32>
      %48 = math.absf %47 : vector<8x8x32xf32>
      %49 = vector.shape_cast %48 : vector<8x8x32xf32> to vector<64x32xf32>
      %cst_33 = arith.constant dense<0.000000e+00> : vector<64x128xf32>
      %50 = tpu.matmul %49, %22, %cst_33 {dimension_numbers = #tpu.dot_dimension_numbers<[1], [0], [0], [1], [0, 0, 1, 1], [], []>} : vector<64x32xf32>, vector<32x128xf32>, vector<64x128xf32> -> vector<64x128xf32>
      %cst_34 = arith.constant 0.000000e+00 : f32
      %51 = vector.broadcast %cst_34 : f32 to vector<64x128xf32>
      %52 = arith.subf %51, %50 : vector<64x128xf32>
      %53 = math.exp %52 : vector<64x128xf32>
      %54 = vector.shape_cast %53 : vector<64x128xf32> to vector<8x8x128xf32>
      %cst_35 = arith.constant dense<0.000000e+00> : vector<8x128xf32>
      %55 = vector.multi_reduction <add>, %54, %cst_35 [1] : vector<8x8x128xf32> to vector<8x128xf32>
      %cst_36 = arith.constant 1.000000e+00 : f32
      %56 = vector.broadcast %cst_36 : f32 to vector<8x128xf32>
      %57 = arith.subf %55, %56 : vector<8x128xf32>
      %cst_37 = arith.constant dense<0.000000e+00> : vector<8x1xf32>
      %58 = tpu.matmul %57, %23, %cst_37 {dimension_numbers = #tpu.dot_dimension_numbers<[1], [0], [0], [1], [0, 0, 1, 1], [], []>} : vector<8x128xf32>, vector<128x1xf32>, vector<8x1xf32> -> vector<8x1xf32>
      %59 = arith.addf %42, %58 : vector<8x1xf32>
      %60 = vector.broadcast %24 : vector<1x1xf32> to vector<8x1xf32>
      %61 = arith.addf %59, %60 : vector<8x1xf32>
      %c0_38 = arith.constant 0 : index
      %c0_39 = arith.constant 0 : index
      %62 = vector.load %arg6[%c0_38, %c0_39] : memref<8x1xf32, #tpu.memory_space<vmem>>, vector<8x1xf32>
      tpu.vector_store %arg6[%c0_38, %c0_39], %61 {strides = array<i32>} : memref<8x1xf32, #tpu.memory_space<vmem>>, vector<8x1xf32>,
    } else {
    }
    return
  }
  func.func @transform_0(%arg0: i32) -> (i32, i32) {
    %c0_i32 = arith.constant 0 : i32
    %c0_i32_0 = arith.constant 0 : i32
    return %c0_i32, %arg0 : i32, i32
  }
  func.func @transform_1(%arg0: i32) -> (i32, i32) {
    %c0_i32 = arith.constant 0 : i32
    %c0_i32_0 = arith.constant 0 : i32
    return %c0_i32, %arg0 : i32, i32
  }
  func.func @transform_2(%arg0: i32) -> (i32, i32) {
    %c0_i32 = arith.constant 0 : i32
    %c0_i32_0 = arith.constant 0 : i32
    return %arg0, %c0_i32 : i32, i32
  }
  func.func @transform_3(%arg0: i32) -> (i32, i32) {
    %c0_i32 = arith.constant 0 : i32
    %c0_i32_0 = arith.constant 0 : i32
    return %arg0, %c0_i32 : i32, i32
  }
  func.func @transform_4(%arg0: i32) -> (i32, i32) {
    %c0_i32 = arith.constant 0 : i32
    %c0_i32_0 = arith.constant 0 : i32
    %c0_i32_1 = arith.constant 0 : i32
    return %c0_i32, %c0_i32_0 : i32, i32
  }
  func.func @transform_5(%arg0: i32) -> (i32, i32) {
    %c0_i32 = arith.constant 0 : i32
    %c0_i32_0 = arith.constant 0 : i32
    %c0_i32_1 = arith.constant 0 : i32
    return %c0_i32, %c0_i32_0 : i32, i32
  }
}

</mosaic_0001>

<llo_original>
// kernel: _lambda_.1
$region0: #{_lambda_.1}
  #allocation0 [shape = 'u32[]', space=smem, size = 0x4, offset = 0x4, fixed_abs, tag = 'smem constant byte address 0x4 - core index']
  #allocation1 [shape = 'u32[144,128]{1,0:T(1,128)}', space=vmem, size = 0x12000, scoped, tag = 'internal scratch']
  #allocation2 [shape = 'f32[8,32]{1,0:T(8,128)}', space=vmem, size = 0x1000, scoped, tag = 'scratch operand']
  %s0 = inlined_call_operand.vmem [shape: bf16[8,16], index: 0, kind: input, shape index: {}]
  %s1 = inlined_call_operand.vmem [shape: bf16[8,16], index: 1, kind: input, shape index: {}]
  %s2 = inlined_call_operand.vmem [shape: bf16[16,32], index: 2, kind: input, shape index: {}]
  %s3 = inlined_call_operand.vmem [shape: bf16[16,32], index: 3, kind: input, shape index: {}]
  %s4 = inlined_call_operand.hbm [shape: f32[480,128], index: 4, kind: input, shape index: {}]
  %s5 = inlined_call_operand.vmem [shape: f32[8,1], index: 5, kind: output, shape index: {}]
  %s6 = sld [smem:[#allocation0]]
  $region42: #{_lambda_.1} parent=0
    _
  %s8 = ssub.s32 1, %s6
  %s9 = scalar_select 0, %s8, %s6
  $region1: #{_lambda_.1} parent=0
    #allocation3 [shape = 'u8[245760]{0}', space=vmem, size = 0x3c000, scoped, tag = 'input window, operand 4, single buffered']
    #allocation4 [shape = 's32[1]{0}', space=sflag, size = 0x4, scoped, tag = 'scoped memory for _lambda_.1']
    %10 = vsyncpa [#allocation4], 0
    // Predicated region
    $region2: #{_lambda_.1} parent=1 // pred_check
      _
    $region3: #{_lambda_.1} parent=1 // pred_check_branch
      %12 = sbr.rel (0) target = $region5
    $region4: #{_lambda_.1} parent=1 // pred_region
      _
    $region5: #{_lambda_.1} parent=1 // pred_fallthru
      _
    // Predicated region
    $region6: #{_lambda_.1} parent=1 // pred_check
      _
    $region7: #{_lambda_.1} parent=1 // pred_check_branch
      %14 = sbr.rel (0) target = $region9
    $region8: #{_lambda_.1} parent=1 // pred_region
      _
    $region9: #{_lambda_.1} parent=1 // pred_fallthru
      _
    // Predicated region
    $region10: #{_lambda_.1} parent=1 // pred_check
      _
    $region11: #{_lambda_.1} parent=1 // pred_check_branch
      %16 = sbr.rel (0) target = $region13
    $region12: #{_lambda_.1} parent=1 // pred_region
      _
    $region13: #{_lambda_.1} parent=1 // pred_fallthru
      _
    // Predicated region
    $region14: #{_lambda_.1} parent=1 // pred_check
      _
    $region15: #{_lambda_.1} parent=1 // pred_check_branch
      %18 = sbr.rel (0) target = $region17
    $region16: #{_lambda_.1} parent=1 // pred_region
      _
    $region17: #{_lambda_.1} parent=1 // pred_fallthru
      _
    // Predicated region
    $region18: #{_lambda_.1} parent=1 // pred_check
      _
    $region19: #{_lambda_.1} parent=1 // pred_check_branch
      %20 = sbr.rel (0) target = $region21
    $region20: #{_lambda_.1} parent=1 // pred_region
      %s22 = ssub.s32 7680, 7680
      %23 = vsyncadd [#allocation4], %s22
      %s24 = sshll.u32 [#allocation3], 4
      %s25 = int_to_ptr.vmem [resolvable:$true] %s24
      %30 = dma.hbm_to_vmem [thread:$0]  %s4, 7680, %s25, [#allocation4], 128, 128, 8
    $region21: #{_lambda_.1} parent=1 // pred_fallthru
      _
    // Predicated region
    $region22: #{_lambda_.1} parent=1 // pred_check
      _
    $region23: #{_lambda_.1} parent=1 // pred_check_branch
      %32 = sbr.rel (0) target = $region25
    $region24: #{_lambda_.1} parent=1 // pred_region
      %33 = dma.done [#allocation4], 7680
    $region25: #{_lambda_.1} parent=1 // pred_fallthru
      _
    %p35 = scmp.eq.s32.totalorder 0, 0
    // Predicated region
    $region26: #{_lambda_.1} parent=1 // pred_check
      %p36 = pneg %p35
    $region27: #{_lambda_.1} parent=1 // pred_check_branch
      %38 = sbr.rel (%p36) target = $region29
    $region28: #{_lambda_.1} parent=1 // pred_region
      %vm39 = vcmask 261120
      %40 = vst.msk [vmem:[#allocation2] sm:$0xff] %vm39, 0.0
    $region29: #{_lambda_.1} parent=1 // pred_fallthru
      _
    %v41 = vld [vmem:[#allocation2] sm:$0xff]
    %v42 = vld [vmem:[%s0] sm:$0xf]
    %v43 = vld [vmem:[%s2] sm:$0xf]
    %v44 = vld [vmem:[%s2 + $0x4] sm:$0xf]
    %v45 = vld [vmem:[%s1] sm:$0xf]
    %v46 = vld [vmem:[%s3] sm:$0xf]
    %v47 = vld [vmem:[%s3 + $0x4] sm:$0xf]
    %v50 = vunpack.c.l.b16 %v46
    %v51 = vunpack.c.l.b16 %v47
    %v52 = vpack.c.b16 %v51, %v50
    %vm54 = vcmask 130048
    %v56 = vsel %vm54, %v45, 0
    %58 = vmatprep.subr.bf16.mxu0 0
    %59 = vmatpush1.bf16.msra.mxu0 %v52
    %60 = vmatprep.subr.bf16.mxu0 0
    %61 = vmatpush1.bf16.msra.mxu0 0
    %62 = vmatprep.subr.bf16.mxu0 0
    %63 = vmatpush1.bf16.msra.mxu0 0
    %64 = vmatprep.subr.bf16.mxu0 0
    %65 = vmatpush1.bf16.msra.mxu0 0
    %66 = vmatprep.subr.bf16.mxu0 0
    %67 = vmatpush1.bf16.msra.mxu0 0
    %68 = vmatprep.subr.bf16.mxu0 0
    %69 = vmatpush1.bf16.msra.mxu0 0
    %70 = vmatprep.subr.bf16.mxu0 0
    %71 = vmatpush1.bf16.msra.mxu0 0
    %72 = vmatprep.subr.bf16.mxu0 0
    %73 = vmatpush1.bf16.msra.mxu0 0
    %74 = vmatprep.subr.bf16.mxu0 0
    %75 = vmatpush1.bf16.msra.mxu0 0
    %76 = vmatprep.subr.bf16.mxu0 0
    %77 = vmatpush1.bf16.msra.mxu0 0
    %78 = vmatprep.subr.bf16.mxu0 0
    %79 = vmatpush1.bf16.msra.mxu0 0
    %80 = vmatprep.subr.bf16.mxu0 0
    %81 = vmatpush1.bf16.msra.mxu0 0
    %82 = vmatprep.subr.bf16.mxu0 0
    %83 = vmatpush1.bf16.msra.mxu0 0
    %84 = vmatprep.subr.bf16.mxu0 0
    %85 = vmatpush1.bf16.msra.mxu0 0
    %86 = vmatprep.subr.bf16.mxu0 0
    %87 = vmatpush1.bf16.msra.mxu0 0
    %88 = vmatprep.subr.bf16.mxu0 0
    %89 = vmatpush1.bf16.msra.mxu0 0
    %90 = vmatprep.mubr.bf16.mxu0 0
    %91 = vmatmul.mubr.bf16.gmra.mrb[0].mxu0 %v56
    %v92 = vpop.f32.mrb[0].mxu0
    %v93 = vadd.f32 0.0, %v92
    %v94 = vpop.f32.mrb[0].mxu0
    %v95 = vpop.f32.mrb[0].mxu0
    %v96 = vpop.f32.mrb[0].mxu0
    %97 = vdwg.mxu0
    %v100 = vunpack.c.l.b16 %v43
    %v101 = vunpack.c.l.b16 %v44
    %v102 = vpack.c.b16 %v101, %v100
    %v105 = vsel %vm54, %v42, 0
    %107 = vmatprep.subr.bf16.mxu0 0
    %108 = vmatpush1.bf16.msra.mxu0 %v102
    %109 = vmatprep.subr.bf16.mxu0 0
    %110 = vmatpush1.bf16.msra.mxu0 0
    %111 = vmatprep.subr.bf16.mxu0 0
    %112 = vmatpush1.bf16.msra.mxu0 0
    %113 = vmatprep.subr.bf16.mxu0 0
    %114 = vmatpush1.bf16.msra.mxu0 0
    %115 = vmatprep.subr.bf16.mxu0 0
    %116 = vmatpush1.bf16.msra.mxu0 0
    %117 = vmatprep.subr.bf16.mxu0 0
    %118 = vmatpush1.bf16.msra.mxu0 0
    %119 = vmatprep.subr.bf16.mxu0 0
    %120 = vmatpush1.bf16.msra.mxu0 0
    %121 = vmatprep.subr.bf16.mxu0 0
    %122 = vmatpush1.bf16.msra.mxu0 0
    %123 = vmatprep.subr.bf16.mxu0 0
    %124 = vmatpush1.bf16.msra.mxu0 0
    %125 = vmatprep.subr.bf16.mxu0 0
    %126 = vmatpush1.bf16.msra.mxu0 0
    %127 = vmatprep.subr.bf16.mxu0 0
    %128 = vmatpush1.bf16.msra.mxu0 0
    %129 = vmatprep.subr.bf16.mxu0 0
    %130 = vmatpush1.bf16.msra.mxu0 0
    %131 = vmatprep.subr.bf16.mxu0 0
    %132 = vmatpush1.bf16.msra.mxu0 0
    %133 = vmatprep.subr.bf16.mxu0 0
    %134 = vmatpush1.bf16.msra.mxu0 0
    %135 = vmatprep.subr.bf16.mxu0 0
    %136 = vmatpush1.bf16.msra.mxu0 0
    %137 = vmatprep.subr.bf16.mxu0 0
    %138 = vmatpush1.bf16.msra.mxu0 0
    %139 = vmatprep.mubr.bf16.mxu0 0
    %140 = vmatmul.mubr.bf16.gmra.mrb[0].mxu0 %v105
    %v141 = vpop.f32.mrb[0].mxu0
    %v142 = vadd.f32 %v93, %v141
    %v143 = vpop.f32.mrb[0].mxu0
    %v144 = vpop.f32.mrb[0].mxu0
    %v145 = vpop.f32.mrb[0].mxu0
    %146 = vdwg.mxu0
    %v147 = vadd.f32 %v41, %v142
    %vm148 = vcmask 261120
    %149 = vst.msk [vmem:[#allocation2] sm:$0xff] %vm148, %v147
    // Predicated region
    $region30: #{_lambda_.1} parent=1 // pred_check
      %p150 = pneg %p35
    $region31: #{_lambda_.1} parent=1 // pred_check_branch
      %152 = sbr.rel (%p150) target = $region33
    $region32: #{_lambda_.1} parent=1 // pred_region
      %v153 = vld [vmem:[#allocation3] sm:$0x1]
      %v154 = vld [vmem:[#allocation3 + $0x8] sm:$0xff]
      %v155 = vld [vmem:[#allocation3 + $0x10] sm:$0xff]
      %v156 = vld [vmem:[#allocation3 + $0x18] sm:$0xff]
      %v157 = vld [vmem:[#allocation3 + $0x20] sm:$0xff]
      %v158 = vld [vmem:[#allocation3 + $0x28] sm:$0x1]
      %v159 = vld [vmem:[#allocation3 + $0x30] sm:$0xff]
      %v160 = vld [vmem:[#allocation3 + $0x38] sm:$0xff]
      %v161 = vld [vmem:[#allocation3 + $0x40] sm:$0xff]
      %v162 = vld [vmem:[#allocation3 + $0x48] sm:$0xff]
      %v163 = vld [vmem:[#allocation3 + $0x50] sm:$0xff]
      %v164 = vld [vmem:[#allocation3 + $0x58] sm:$0xff]
      %v165 = vld [vmem:[#allocation3 + $0x60] sm:$0xff]
      %v166 = vld [vmem:[#allocation3 + $0x68] sm:$0xff]
      %v167 = vld [vmem:[#allocation3 + $0x70] sm:$0xff]
      %v168 = vld [vmem:[#allocation3 + $0x78] sm:$0xff]
      %v169 = vld [vmem:[#allocation3 + $0x80] sm:$0xff]
      %v170 = vld [vmem:[#allocation3 + $0x88] sm:$0xff]
      %v171 = vld [vmem:[#allocation3 + $0x90] sm:$0xff]
      %v172 = vld [vmem:[#allocation3 + $0x98] sm:$0xff]
      %v173 = vld [vmem:[#allocation3 + $0xa0] sm:$0xff]
      %v174 = vld [vmem:[#allocation3 + $0xa8] sm:$0xff]
      %v175 = vld [vmem:[#allocation3 + $0xb0] sm:$0x1]
      %v176 = vld [vmem:[#allocation3 + $0xb8] sm:$0xff]
      %v177 = vld [vmem:[#allocation3 + $0xc0] sm:$0xff]
      %v178 = vld [vmem:[#allocation3 + $0xc8] sm:$0xff]
      %v179 = vld [vmem:[#allocation3 + $0xd0] sm:$0xff]
      %v180 = vld [vmem:[#allocation3 + $0xd8] sm:$0xff]
      %v181 = vld [vmem:[#allocation3 + $0xe0] sm:$0xff]
      %v182 = vld [vmem:[#allocation3 + $0xe8] sm:$0xff]
      %v183 = vld [vmem:[#allocation3 + $0xf0] sm:$0xff]
      %v184 = vld [vmem:[#allocation3 + $0xf8] sm:$0xff]
      %v185 = vld [vmem:[#allocation3 + $0x100] sm:$0xff]
      %v186 = vld [vmem:[#allocation3 + $0x108] sm:$0xff]
      %v187 = vld [vmem:[#allocation3 + $0x110] sm:$0xff]
      %v188 = vld [vmem:[#allocation3 + $0x118] sm:$0xff]
      %v189 = vld [vmem:[#allocation3 + $0x120] sm:$0xff]
      %v190 = vld [vmem:[#allocation3 + $0x128] sm:$0xff]
      %v191 = vld [vmem:[#allocation3 + $0x130] sm:$0xff]
      %v192 = vld [vmem:[#allocation3 + $0x138] sm:$0xff]
      %v193 = vld [vmem:[#allocation3 + $0x140] sm:$0xff]
      %v194 = vld [vmem:[#allocation3 + $0x148] sm:$0xff]
      %v195 = vld [vmem:[#allocation3 + $0x150] sm:$0xff]
      %v196 = vld [vmem:[#allocation3 + $0x158] sm:$0xff]
      %v197 = vld [vmem:[#allocation3 + $0x160] sm:$0xff]
      %v198 = vld [vmem:[#allocation3 + $0x168] sm:$0xff]
      %v199 = vld [vmem:[#allocation3 + $0x170] sm:$0xff]
      %v200 = vld [vmem:[#allocation3 + $0x178] sm:$0xff]
      %v201 = vld [vmem:[#allocation3 + $0x180] sm:$0xff]
      %v202 = vld [vmem:[#allocation3 + $0x188] sm:$0xff]
      %v203 = vld [vmem:[#allocation3 + $0x190] sm:$0xff]
      %v204 = vld [vmem:[#allocation3 + $0x198] sm:$0xff]
      %v205 = vld [vmem:[#allocation3 + $0x1a0] sm:$0xff]
      %v206 = vld [vmem:[#allocation3 + $0x1a8] sm:$0xff]
      %v207 = vld [vmem:[#allocation3 + $0x1b0] sm:$0xff]
      %v208 = vld [vmem:[#allocation3 + $0x1b8] sm:$0xff]
      %v209 = vld [vmem:[#allocation3 + $0x1c0] sm:$0xff]
      %v210 = vld [vmem:[#allocation3 + $0x1c8] sm:$0xff]
      %v211 = vld [vmem:[#allocation3 + $0x1d0] sm:$0xff]
      %v212 = vld [vmem:[#allocation3 + $0x1d8] sm:$0x1]
      %v213 = vld [vmem:[#allocation2] sm:$0xff]
      %v214 = vlaneseq
      %v215 = vshrl.u32 %v214, 7
      %v216 = vsub.s32 0, %v215
      %v217 = vrot.slane %v153, %v216
      %v218 = vadd.f32 %v213, %v217
      %v219 = vmax.f32 %v218, 0.0
      %v220 = vlaneseq
      %v221 = vshrl.u32 %v220, 7
      %v222 = vsub.s32 0, %v221
      %v223 = vrot.slane %v158, %v222
      %v225 = vsel %vm148, %v219, 0
      %227 = vmatprep.subr.mxu0 0.0
      %228 = vmatpush1.msra.mxu0 %v154
      %229 = vmatprep.subr.mxu0 0.0
      %230 = vmatpush1.msra.mxu0 %v155
      %231 = vmatprep.subr.mxu0 0.0
      %232 = vmatpush1.msra.mxu0 %v156
      %233 = vmatprep.subr.mxu0 0.0
      %234 = vmatpush1.msra.mxu0 %v157
      %235 = vmatprep.subr.mxu0 0.0
      %236 = vmatpush1.msra.mxu0 0.0
      %237 = vmatprep.subr.mxu0 0.0
      %238 = vmatpush1.msra.mxu0 0.0
      %239 = vmatprep.subr.mxu0 0.0
      %240 = vmatpush1.msra.mxu0 0.0
      %241 = vmatprep.subr.mxu0 0.0
      %242 = vmatpush1.msra.mxu0 0.0
      %243 = vmatprep.subr.mxu0 0.0
      %244 = vmatpush1.msra.mxu0 0.0
      %245 = vmatprep.subr.mxu0 0.0
      %246 = vmatpush1.msra.mxu0 0.0
      %247 = vmatprep.subr.mxu0 0.0
      %248 = vmatpush1.msra.mxu0 0.0
      %249 = vmatprep.subr.mxu0 0.0
      %250 = vmatpush1.msra.mxu0 0.0
      %251 = vmatprep.subr.mxu0 0.0
      %252 = vmatpush1.msra.mxu0 0.0
      %253 = vmatprep.subr.mxu0 0.0
      %254 = vmatpush1.msra.mxu0 0.0
      %255 = vmatprep.subr.mxu0 0.0
      %256 = vmatpush1.msra.mxu0 0.0
      %257 = vmatprep.subr.mxu0 0.0
      %258 = vmatpush1.msra.mxu0 0.0
      %259 = vmatprep.subr.mxu0 0.0
      %260 = vmatpush1.msra.mxu0 0.0
      %261 = vmatprep.subr.mxu0 0.0
      %262 = vmatpush1.msra.mxu0 0.0
      %263 = vmatprep.subr.mxu0 0.0
      %264 = vmatpush1.msra.mxu0 0.0
      %265 = vmatprep.subr.mxu0 0.0
      %266 = vmatpush1.msra.mxu0 0.0
      %267 = vmatprep.subr.mxu0 0.0
      %268 = vmatpush1.msra.mxu0 0.0
      %269 = vmatprep.subr.mxu0 0.0
      %270 = vmatpush1.msra.mxu0 0.0
      %271 = vmatprep.subr.mxu0 0.0
      %272 = vmatpush1.msra.mxu0 0.0
      %273 = vmatprep.subr.mxu0 0.0
      %274 = vmatpush1.msra.mxu0 0.0
      %275 = vmatprep.subr.mxu0 0.0
      %276 = vmatpush1.msra.mxu0 0.0
      %277 = vmatprep.subr.mxu0 0.0
      %278 = vmatpush1.msra.mxu0 0.0
      %279 = vmatprep.subr.mxu0 0.0
      %280 = vmatpush1.msra.mxu0 0.0
      %281 = vmatprep.subr.mxu0 0.0
      %282 = vmatpush1.msra.mxu0 0.0
      %283 = vmatprep.subr.mxu0 0.0
      %284 = vmatpush1.msra.mxu0 0.0
      %285 = vmatprep.subr.mxu0 0.0
      %286 = vmatpush1.msra.mxu0 0.0
      %287 = vmatprep.subr.mxu0 0.0
      %288 = vmatpush1.msra.mxu0 0.0
      %289 = vmatprep.subr.mxu0 0.0
      %290 = vmatpush1.msra.mxu0 0.0
      %291 = vmatprep.mubr.f32.mxu0 0.0
      %292 = vmatmul.mubr.f32.gmra.mrb[0].mxu0 %v225
      %v293 = vpop.f32.mrb[0].mxu0
      %v294 = vadd.f32 %v223, %v293
      %v295 = vpop.f32.mrb[0].mxu0
      %296 = vdwg.mxu0
      %v297 = vmax.f32 %v294, 0.0
      %v298 = vlaneseq
      %v299 = vshrl.u32 %v298, 7
      %v300 = vsub.s32 0, %v299
      %v301 = vrot.slane %v175, %v300
      %302 = vmatprep.subr.mxu0 0.0
      %303 = vmatpush1.msra.mxu0 %v159
      %304 = vmatprep.subr.mxu0 0.0
      %305 = vmatpush1.msra.mxu0 %v160
      %306 = vmatprep.subr.mxu0 0.0
      %307 = vmatpush1.msra.mxu0 %v161
      %308 = vmatprep.subr.mxu0 0.0
      %309 = vmatpush1.msra.mxu0 %v162
      %310 = vmatprep.subr.mxu0 0.0
      %311 = vmatpush1.msra.mxu0 %v163
      %312 = vmatprep.subr.mxu0 0.0
      %313 = vmatpush1.msra.mxu0 %v164
      %314 = vmatprep.subr.mxu0 0.0
      %315 = vmatpush1.msra.mxu0 %v165
      %316 = vmatprep.subr.mxu0 0.0
      %317 = vmatpush1.msra.mxu0 %v166
      %318 = vmatprep.subr.mxu0 0.0
      %319 = vmatpush1.msra.mxu0 %v167
      %320 = vmatprep.subr.mxu0 0.0
      %321 = vmatpush1.msra.mxu0 %v168
      %322 = vmatprep.subr.mxu0 0.0
      %323 = vmatpush1.msra.mxu0 %v169
      %324 = vmatprep.subr.mxu0 0.0
      %325 = vmatpush1.msra.mxu0 %v170
      %326 = vmatprep.subr.mxu0 0.0
      %327 = vmatpush1.msra.mxu0 %v171
      %328 = vmatprep.subr.mxu0 0.0
      %329 = vmatpush1.msra.mxu0 %v172
      %330 = vmatprep.subr.mxu0 0.0
      %331 = vmatpush1.msra.mxu0 %v173
      %332 = vmatprep.subr.mxu0 0.0
      %333 = vmatpush1.msra.mxu0 %v174
      %334 = vmatprep.subr.mxu0 0.0
      %335 = vmatpush1.msra.mxu0 0.0
      %336 = vmatprep.subr.mxu0 0.0
      %337 = vmatpush1.msra.mxu0 0.0
      %338 = vmatprep.subr.mxu0 0.0
      %339 = vmatpush1.msra.mxu0 0.0
      %340 = vmatprep.subr.mxu0 0.0
      %341 = vmatpush1.msra.mxu0 0.0
      %342 = vmatprep.subr.mxu0 0.0
      %343 = vmatpush1.msra.mxu0 0.0
      %344 = vmatprep.subr.mxu0 0.0
      %345 = vmatpush1.msra.mxu0 0.0
      %346 = vmatprep.subr.mxu0 0.0
      %347 = vmatpush1.msra.mxu0 0.0
      %348 = vmatprep.subr.mxu0 0.0
      %349 = vmatpush1.msra.mxu0 0.0
      %350 = vmatprep.subr.mxu0 0.0
      %351 = vmatpush1.msra.mxu0 0.0
      %352 = vmatprep.subr.mxu0 0.0
      %353 = vmatpush1.msra.mxu0 0.0
      %354 = vmatprep.subr.mxu0 0.0
      %355 = vmatpush1.msra.mxu0 0.0
      %356 = vmatprep.subr.mxu0 0.0
      %357 = vmatpush1.msra.mxu0 0.0
      %358 = vmatprep.subr.mxu0 0.0
      %359 = vmatpush1.msra.mxu0 0.0
      %360 = vmatprep.subr.mxu0 0.0
      %361 = vmatpush1.msra.mxu0 0.0
      %362 = vmatprep.subr.mxu0 0.0
      %363 = vmatpush1.msra.mxu0 0.0
      %364 = vmatprep.subr.mxu0 0.0
      %365 = vmatpush1.msra.mxu0 0.0
      %366 = vmatprep.mubr.f32.mxu0 0.0
      %367 = vmatmul.mubr.f32.gmra.mrb[0].mxu0 %v297
      %v368 = vpop.f32.mrb[0].mxu0
      %v369 = vadd.f32 %v301, %v368
      %v370 = vpop.f32.mrb[0].mxu0
      %371 = vdwg.mxu0
      %v372 = vmax.f32 %v369, 0.0
      %373 = vmatprep.subr.mxu0 0.0
      %374 = vmatpush1.msra.mxu0 %v176
      %375 = vmatprep.subr.mxu0 0.0
      %376 = vmatpush1.msra.mxu0 %v177
      %377 = vmatprep.subr.mxu0 0.0
      %378 = vmatpush1.msra.mxu0 %v178
      %379 = vmatprep.subr.mxu0 0.0
      %380 = vmatpush1.msra.mxu0 %v179
      %381 = vmatprep.subr.mxu0 0.0
      %382 = vmatpush1.msra.mxu0 %v180
      %383 = vmatprep.subr.mxu0 0.0
      %384 = vmatpush1.msra.mxu0 %v181
      %385 = vmatprep.subr.mxu0 0.0
      %386 = vmatpush1.msra.mxu0 %v182
      %387 = vmatprep.subr.mxu0 0.0
      %388 = vmatpush1.msra.mxu0 %v183
      %389 = vmatprep.subr.mxu0 0.0
      %390 = vmatpush1.msra.mxu0 %v184
      %391 = vmatprep.subr.mxu0 0.0
      %392 = vmatpush1.msra.mxu0 %v185
      %393 = vmatprep.subr.mxu0 0.0
      %394 = vmatpush1.msra.mxu0 %v186
      %395 = vmatprep.subr.mxu0 0.0
      %396 = vmatpush1.msra.mxu0 %v187
      %397 = vmatprep.subr.mxu0 0.0
      %398 = vmatpush1.msra.mxu0 %v188
      %399 = vmatprep.subr.mxu0 0.0
      %400 = vmatpush1.msra.mxu0 %v189
      %401 = vmatprep.subr.mxu0 0.0
      %402 = vmatpush1.msra.mxu0 %v190
      %403 = vmatprep.subr.mxu0 0.0
      %404 = vmatpush1.msra.mxu0 %v191
      %405 = vmatprep.subr.mxu0 0.0
      %406 = vmatpush1.msra.mxu0 0.0
      %407 = vmatprep.subr.mxu0 0.0
      %408 = vmatpush1.msra.mxu0 0.0
      %409 = vmatprep.subr.mxu0 0.0
      %410 = vmatpush1.msra.mxu0 0.0
      %411 = vmatprep.subr.mxu0 0.0
      %412 = vmatpush1.msra.mxu0 0.0
      %413 = vmatprep.subr.mxu0 0.0
      %414 = vmatpush1.msra.mxu0 0.0
      %415 = vmatprep.subr.mxu0 0.0
      %416 = vmatpush1.msra.mxu0 0.0
      %417 = vmatprep.subr.mxu0 0.0
      %418 = vmatpush1.msra.mxu0 0.0
      %419 = vmatprep.subr.mxu0 0.0
      %420 = vmatpush1.msra.mxu0 0.0
      %421 = vmatprep.subr.mxu0 0.0
      %422 = vmatpush1.msra.mxu0 0.0
      %423 = vmatprep.subr.mxu0 0.0
      %424 = vmatpush1.msra.mxu0 0.0
      %425 = vmatprep.subr.mxu0 0.0
      %426 = vmatpush1.msra.mxu0 0.0
      %427 = vmatprep.subr.mxu0 0.0
      %428 = vmatpush1.msra.mxu0 0.0
      %429 = vmatprep.subr.mxu0 0.0
      %430 = vmatpush1.msra.mxu0 0.0
      %431 = vmatprep.subr.mxu0 0.0
      %432 = vmatpush1.msra.mxu0 0.0
      %433 = vmatprep.subr.mxu0 0.0
      %434 = vmatpush1.msra.mxu0 0.0
      %435 = vmatprep.subr.mxu0 0.0
      %436 = vmatpush1.msra.mxu0 0.0
      %437 = vmatprep.mubr.f32.mxu0 0.0
      %438 = vmatmul.mubr.f32.gmra.mrb[0].mxu0 %v372
      %v439 = vpop.f32.mrb[0].mxu0
      %v440 = vadd.f32 0.0, %v439
      %v441 = vpop.f32.mrb[0].mxu0
      %442 = vdwg.mxu0
      %v444 = vcombine.high %v440, %v440
      %v446 = vunpack.c.l.s4 1966171168
      %v447 = vunpack.c.0.s8 %v446
      %v448 = vlaneseq
      %v449 = vshrl.u32 %v448, 7
      %v450 = vsub.s32 %v447, %v449
      %v451 = vrot.slane %v440, %v450
      %v453 = vunpack.c.l.s4 1966171168
      %v454 = vunpack.c.0.s8 %v453
      %v455 = vlaneseq
      %v456 = vshrl.u32 %v455, 7
      %v457 = vsub.s32 %v454, %v456
      %v458 = vrot.slane %v444, %v457
      %v459 = vcombine.high %v451, %v451
      %v460 = vcombine.high %v458, %v458
      %v462 = vunpack.c.l.s4 1966171168
      %v463 = vunpack.c.0.s8 %v462
      %v464 = vlaneseq
      %v465 = vshrl.u32 %v464, 7
      %v466 = vsub.s32 %v463, %v465
      %v467 = vrot.slane %v451, %v466
      %v469 = vunpack.c.l.s4 1966171168
      %v470 = vunpack.c.0.s8 %v469
      %v471 = vlaneseq
      %v472 = vshrl.u32 %v471, 7
      %v473 = vsub.s32 %v470, %v472
      %v474 = vrot.slane %v458, %v473
      %v476 = vunpack.c.l.s4 1966171168
      %v477 = vunpack.c.0.s8 %v476
      %v478 = vlaneseq
      %v479 = vshrl.u32 %v478, 7
      %v480 = vsub.s32 %v477, %v479
      %v481 = vrot.slane %v459, %v480
      %v483 = vunpack.c.l.s4 1966171168
      %v484 = vunpack.c.0.s8 %v483
      %v485 = vlaneseq
      %v486 = vshrl.u32 %v485, 7
      %v487 = vsub.s32 %v484, %v486
      %v488 = vrot.slane %v460, %v487
      %v489 = vcombine.high %v467, %v467
      %v490 = vcombine.high %v474, %v474
      %v491 = vcombine.high %v481, %v481
      %v492 = vcombine.high %v488, %v488
      %v493 = vlaneseq
      %v494 = vshrl.u32 %v493, 7
      %v495 = vsub.s32 0, %v494
      %v496 = vrot.slane %v467, %v495
      %v497 = vlaneseq
      %v498 = vshrl.u32 %v497, 7
      %v499 = vsub.s32 0, %v498
      %v500 = vrot.slane %v481, %v499
      %v501 = vlaneseq
      %v502 = vshrl.u32 %v501, 7
      %v503 = vsub.s32 0, %v502
      %v504 = vrot.slane %v489, %v503
      %v505 = vlaneseq
      %v506 = vshrl.u32 %v505, 7
      %v507 = vsub.s32 0, %v506
      %v508 = vrot.slane %v491, %v507
      %v509 = vlaneseq
      %v510 = vshrl.u32 %v509, 7
      %v511 = vsub.s32 0, %v510
      %v512 = vrot.slane %v474, %v511
      %v513 = vlaneseq
      %v514 = vshrl.u32 %v513, 7
      %v515 = vsub.s32 0, %v514
      %v516 = vrot.slane %v488, %v515
      %v517 = vlaneseq
      %v518 = vshrl.u32 %v517, 7
      %v519 = vsub.s32 0, %v518
      %v520 = vrot.slane %v490, %v519
      %v521 = vlaneseq
      %v522 = vshrl.u32 %v521, 7
      %v523 = vsub.s32 0, %v522
      %v524 = vrot.slane %v492, %v523
      %v533 = vsub.f32 %v496, %v440
      %v534 = vsub.f32 %v500, %v440
      %v535 = vsub.f32 %v504, %v440
      %v536 = vsub.f32 %v508, %v440
      %v537 = vsub.f32 %v512, %v440
      %v538 = vsub.f32 %v516, %v440
      %v539 = vsub.f32 %v520, %v440
      %v540 = vsub.f32 %v524, %v440
      %v541 = vand.u32 2147483647, %v533
      %v542 = vand.u32 2147483647, %v534
      %v543 = vand.u32 2147483647, %v535
      %v544 = vand.u32 2147483647, %v536
      %v545 = vand.u32 2147483647, %v537
      %v546 = vand.u32 2147483647, %v538
      %v547 = vand.u32 2147483647, %v539
      %v548 = vand.u32 2147483647, %v540
      %v550 = vsel %vm148, %v541, 0
      %v553 = vsel %vm148, %v542, 0
      %v556 = vsel %vm148, %v543, 0
      %v559 = vsel %vm148, %v544, 0
      %v562 = vsel %vm148, %v545, 0
      %v565 = vsel %vm148, %v546, 0
      %v568 = vsel %vm148, %v547, 0
      %v571 = vsel %vm148, %v548, 0
      %573 = vmatprep.subr.mxu0 0.0
      %574 = vmatpush1.msra.mxu0 %v192
      %575 = vmatprep.subr.mxu0 0.0
      %576 = vmatpush1.msra.mxu0 %v193
      %577 = vmatprep.subr.mxu0 0.0
      %578 = vmatpush1.msra.mxu0 %v194
      %579 = vmatprep.subr.mxu0 0.0
      %580 = vmatpush1.msra.mxu0 %v195
      %581 = vmatprep.subr.mxu0 0.0
      %582 = vmatpush1.msra.mxu0 0.0
      %583 = vmatprep.subr.mxu0 0.0
      %584 = vmatpush1.msra.mxu0 0.0
      %585 = vmatprep.subr.mxu0 0.0
      %586 = vmatpush1.msra.mxu0 0.0
      %587 = vmatprep.subr.mxu0 0.0
      %588 = vmatpush1.msra.mxu0 0.0
      %589 = vmatprep.subr.mxu0 0.0
      %590 = vmatpush1.msra.mxu0 0.0
      %591 = vmatprep.subr.mxu0 0.0
      %592 = vmatpush1.msra.mxu0 0.0
      %593 = vmatprep.subr.mxu0 0.0
      %594 = vmatpush1.msra.mxu0 0.0
      %595 = vmatprep.subr.mxu0 0.0
      %596 = vmatpush1.msra.mxu0 0.0
      %597 = vmatprep.subr.mxu0 0.0
      %598 = vmatpush1.msra.mxu0 0.0
      %599 = vmatprep.subr.mxu0 0.0
      %600 = vmatpush1.msra.mxu0 0.0
      %601 = vmatprep.subr.mxu0 0.0
      %602 = vmatpush1.msra.mxu0 0.0
      %603 = vmatprep.subr.mxu0 0.0
      %604 = vmatpush1.msra.mxu0 0.0
      %605 = vmatprep.subr.mxu0 0.0
      %606 = vmatpush1.msra.mxu0 0.0
      %607 = vmatprep.subr.mxu0 0.0
      %608 = vmatpush1.msra.mxu0 0.0
      %609 = vmatprep.subr.mxu0 0.0
      %610 = vmatpush1.msra.mxu0 0.0
      %611 = vmatprep.subr.mxu0 0.0
      %612 = vmatpush1.msra.mxu0 0.0
      %613 = vmatprep.subr.mxu0 0.0
      %614 = vmatpush1.msra.mxu0 0.0
      %615 = vmatprep.subr.mxu0 0.0
      %616 = vmatpush1.msra.mxu0 0.0
      %617 = vmatprep.subr.mxu0 0.0
      %618 = vmatpush1.msra.mxu0 0.0
      %619 = vmatprep.subr.mxu0 0.0
      %620 = vmatpush1.msra.mxu0 0.0
      %621 = vmatprep.subr.mxu0 0.0
      %622 = vmatpush1.msra.mxu0 0.0
      %623 = vmatprep.subr.mxu0 0.0
      %624 = vmatpush1.msra.mxu0 0.0
      %625 = vmatprep.subr.mxu0 0.0
      %626 = vmatpush1.msra.mxu0 0.0
      %627 = vmatprep.subr.mxu0 0.0
      %628 = vmatpush1.msra.mxu0 0.0
      %629 = vmatprep.subr.mxu0 0.0
      %630 = vmatpush1.msra.mxu0 0.0
      %631 = vmatprep.subr.mxu0 0.0
      %632 = vmatpush1.msra.mxu0 0.0
      %633 = vmatprep.subr.mxu0 0.0
      %634 = vmatpush1.msra.mxu0 0.0
      %635 = vmatprep.subr.mxu0 0.0
      %636 = vmatpush1.msra.mxu0 0.0
      %637 = vmatprep.mubr.f32.mxu0 0.0
      %638 = vmatmul.mubr.f32.gmra.mrb[0].mxu0 %v550
      %v639 = vpop.f32.mrb[0].mxu0
      %v640 = vadd.f32 0.0, %v639
      %v641 = vpop.f32.mrb[0].mxu0
      %642 = vmatprep.mubr.f32.mxu0 0.0
      %643 = vmatmul.mubr.f32.gmra.mrb[0].mxu0 %v553
      %v644 = vpop.f32.mrb[0].mxu0
      %v645 = vadd.f32 0.0, %v644
      %v646 = vpop.f32.mrb[0].mxu0
      %647 = vmatprep.mubr.f32.mxu0 0.0
      %648 = vmatmul.mubr.f32.gmra.mrb[0].mxu0 %v556
      %v649 = vpop.f32.mrb[0].mxu0
      %v650 = vadd.f32 0.0, %v649
      %v651 = vpop.f32.mrb[0].mxu0
      %652 = vmatprep.mubr.f32.mxu0 0.0
      %653 = vmatmul.mubr.f32.gmra.mrb[0].mxu0 %v559
      %v654 = vpop.f32.mrb[0].mxu0
      %v655 = vadd.f32 0.0, %v654
      %v656 = vpop.f32.mrb[0].mxu0
      %657 = vmatprep.mubr.f32.mxu0 0.0
      %658 = vmatmul.mubr.f32.gmra.mrb[0].mxu0 %v562
      %v659 = vpop.f32.mrb[0].mxu0
      %v660 = vadd.f32 0.0, %v659
      %v661 = vpop.f32.mrb[0].mxu0
      %662 = vmatprep.mubr.f32.mxu0 0.0
      %663 = vmatmul.mubr.f32.gmra.mrb[0].mxu0 %v565
      %v664 = vpop.f32.mrb[0].mxu0
      %v665 = vadd.f32 0.0, %v664
      %v666 = vpop.f32.mrb[0].mxu0
      %667 = vmatprep.mubr.f32.mxu0 0.0
      %668 = vmatmul.mubr.f32.gmra.mrb[0].mxu0 %v568
      %v669 = vpop.f32.mrb[0].mxu0
      %v670 = vadd.f32 0.0, %v669
      %v671 = vpop.f32.mrb[0].mxu0
      %672 = vmatprep.mubr.f32.mxu0 0.0
      %673 = vmatmul.mubr.f32.gmra.mrb[0].mxu0 %v571
      %v674 = vpop.f32.mrb[0].mxu0
      %v675 = vadd.f32 0.0, %v674
      %v676 = vpop.f32.mrb[0].mxu0
      %677 = vdwg.mxu0
      %v678 = vsub.f32 0.0, %v640
      %v679 = vsub.f32 0.0, %v645
      %v680 = vsub.f32 0.0, %v650
      %v681 = vsub.f32 0.0, %v655
      %v682 = vsub.f32 0.0, %v660
      %v683 = vsub.f32 0.0, %v665
      %v684 = vsub.f32 0.0, %v670
      %v685 = vsub.f32 0.0, %v675
      %v686 = vmul.f32 %v678, 1.442695
      %v687 = vpow.pop %v686
      %v688 = vmul.f32 %v679, 1.442695
      %v689 = vpow.pop %v688
      %v690 = vmul.f32 %v680, 1.442695
      %v691 = vpow.pop %v690
      %v692 = vmul.f32 %v681, 1.442695
      %v693 = vpow.pop %v692
      %v694 = vmul.f32 %v682, 1.442695
      %v695 = vpow.pop %v694
      %v696 = vmul.f32 %v683, 1.442695
      %v697 = vpow.pop %v696
      %v698 = vmul.f32 %v684, 1.442695
      %v699 = vpow.pop %v698
      %v700 = vmul.f32 %v685, 1.442695
      %v701 = vpow.pop %v700
      %v702 = vrot.slane %v687, 4
      %v703 = vadd.f32 %v687, %v702
      %v704 = vrot.slane %v703, 2
      %v705 = vadd.f32 %v703, %v704
      %v706 = vrot.slane %v705, 1
      %v707 = vadd.f32 %v705, %v706
      %v708 = vrot.slane %v689, 4
      %v709 = vadd.f32 %v689, %v708
      %v710 = vrot.slane %v709, 2
      %v711 = vadd.f32 %v709, %v710
      %v712 = vrot.slane %v711, 1
      %v713 = vadd.f32 %v711, %v712
      %v714 = vrot.slane %v691, 4
      %v715 = vadd.f32 %v691, %v714
      %v716 = vrot.slane %v715, 2
      %v717 = vadd.f32 %v715, %v716
      %v718 = vrot.slane %v717, 1
      %v719 = vadd.f32 %v717, %v718
      %v720 = vrot.slane %v693, 4
      %v721 = vadd.f32 %v693, %v720
      %v722 = vrot.slane %v721, 2
      %v723 = vadd.f32 %v721, %v722
      %v724 = vrot.slane %v723, 1
      %v725 = vadd.f32 %v723, %v724
      %v726 = vrot.slane %v695, 4
      %v727 = vadd.f32 %v695, %v726
      %v728 = vrot.slane %v727, 2
      %v729 = vadd.f32 %v727, %v728
      %v730 = vrot.slane %v729, 1
      %v731 = vadd.f32 %v729, %v730
      %v732 = vrot.slane %v697, 4
      %v733 = vadd.f32 %v697, %v732
      %v734 = vrot.slane %v733, 2
      %v735 = vadd.f32 %v733, %v734
      %v736 = vrot.slane %v735, 1
      %v737 = vadd.f32 %v735, %v736
      %v738 = vrot.slane %v699, 4
      %v739 = vadd.f32 %v699, %v738
      %v740 = vrot.slane %v739, 2
      %v741 = vadd.f32 %v739, %v740
      %v742 = vrot.slane %v741, 1
      %v743 = vadd.f32 %v741, %v742
      %v744 = vrot.slane %v701, 4
      %v745 = vadd.f32 %v701, %v744
      %v746 = vrot.slane %v745, 2
      %v747 = vadd.f32 %v745, %v746
      %v748 = vrot.slane %v747, 1
      %v749 = vadd.f32 %v747, %v748
      %v750 = vsub.f32 %v707, 1.0
      %v751 = vsub.f32 %v713, 1.0
      %v752 = vsub.f32 %v719, 1.0
      %v753 = vsub.f32 %v725, 1.0
      %v754 = vsub.f32 %v731, 1.0
      %v755 = vsub.f32 %v737, 1.0
      %v756 = vsub.f32 %v743, 1.0
      %v757 = vsub.f32 %v749, 1.0
      %vm766 = vcmask 1041409
      %v767 = vsel %vm766, %v751, %v750
      %vm768 = vcmask 1042434
      %v769 = vsel %vm768, %v752, %v767
      %vm770 = vcmask 1043459
      %v771 = vsel %vm770, %v753, %v769
      %vm772 = vcmask 1044484
      %v773 = vsel %vm772, %v754, %v771
      %vm774 = vcmask 1045509
      %v775 = vsel %vm774, %v755, %v773
      %vm776 = vcmask 1046534
      %v777 = vsel %vm776, %v756, %v775
      %vm778 = vcmask 1047559
      %v779 = vsel %vm778, %v757, %v777
      %781 = vmatprep.subr.mxu0 0.0
      %782 = vmatpush1.msra.mxu0 %v196
      %783 = vmatprep.subr.mxu0 0.0
      %784 = vmatpush1.msra.mxu0 %v197
      %785 = vmatprep.subr.mxu0 0.0
      %786 = vmatpush1.msra.mxu0 %v198
      %787 = vmatprep.subr.mxu0 0.0
      %788 = vmatpush1.msra.mxu0 %v199
      %789 = vmatprep.subr.mxu0 0.0
      %790 = vmatpush1.msra.mxu0 %v200
      %791 = vmatprep.subr.mxu0 0.0
      %792 = vmatpush1.msra.mxu0 %v201
      %793 = vmatprep.subr.mxu0 0.0
      %794 = vmatpush1.msra.mxu0 %v202
      %795 = vmatprep.subr.mxu0 0.0
      %796 = vmatpush1.msra.mxu0 %v203
      %797 = vmatprep.subr.mxu0 0.0
      %798 = vmatpush1.msra.mxu0 %v204
      %799 = vmatprep.subr.mxu0 0.0
      %800 = vmatpush1.msra.mxu0 %v205
      %801 = vmatprep.subr.mxu0 0.0
      %802 = vmatpush1.msra.mxu0 %v206
      %803 = vmatprep.subr.mxu0 0.0
      %804 = vmatpush1.msra.mxu0 %v207
      %805 = vmatprep.subr.mxu0 0.0
      %806 = vmatpush1.msra.mxu0 %v208
      %807 = vmatprep.subr.mxu0 0.0
      %808 = vmatpush1.msra.mxu0 %v209
      %809 = vmatprep.subr.mxu0 0.0
      %810 = vmatpush1.msra.mxu0 %v210
      %811 = vmatprep.subr.mxu0 0.0
      %812 = vmatpush1.msra.mxu0 %v211
      %813 = vmatprep.subr.mxu0 0.0
      %814 = vmatpush1.msra.mxu0 0.0
      %815 = vmatprep.subr.mxu0 0.0
      %816 = vmatpush1.msra.mxu0 0.0
      %817 = vmatprep.subr.mxu0 0.0
      %818 = vmatpush1.msra.mxu0 0.0
      %819 = vmatprep.subr.mxu0 0.0
      %820 = vmatpush1.msra.mxu0 0.0
      %821 = vmatprep.subr.mxu0 0.0
      %822 = vmatpush1.msra.mxu0 0.0
      %823 = vmatprep.subr.mxu0 0.0
      %824 = vmatpush1.msra.mxu0 0.0
      %825 = vmatprep.subr.mxu0 0.0
      %826 = vmatpush1.msra.mxu0 0.0
      %827 = vmatprep.subr.mxu0 0.0
      %828 = vmatpush1.msra.mxu0 0.0
      %829 = vmatprep.subr.mxu0 0.0
      %830 = vmatpush1.msra.mxu0 0.0
      %831 = vmatprep.subr.mxu0 0.0
      %832 = vmatpush1.msra.mxu0 0.0
      %833 = vmatprep.subr.mxu0 0.0
      %834 = vmatpush1.msra.mxu0 0.0
      %835 = vmatprep.subr.mxu0 0.0
      %836 = vmatpush1.msra.mxu0 0.0
      %837 = vmatprep.subr.mxu0 0.0
      %838 = vmatpush1.msra.mxu0 0.0
      %839 = vmatprep.subr.mxu0 0.0
      %840 = vmatpush1.msra.mxu0 0.0
      %841 = vmatprep.subr.mxu0 0.0
      %842 = vmatpush1.msra.mxu0 0.0
      %843 = vmatprep.subr.mxu0 0.0
      %844 = vmatpush1.msra.mxu0 0.0
      %845 = vmatprep.mubr.f32.mxu0 0.0
      %846 = vmatmul.mubr.f32.gmra.mrb[0].mxu0 %v779
      %v847 = vpop.f32.mrb[0].mxu0
      %v848 = vadd.f32 0.0, %v847
      %v849 = vpop.f32.mrb[0].mxu0
      %850 = vdwg.mxu0
      %852 = vrot.lane.b32.xlu0 %v848, 30
      %v853 = vpop.permute.xlu0 %852
      %v855 = vadd.f32 %v440, %v853
      %v856 = vlaneseq
      %v857 = vshrl.u32 %v856, 7
      %v858 = vsub.s32 0, %v857
      %v859 = vrot.slane %v212, %v858
      %861 = vrot.lane.b32.xlu0 %v859, 30
      %v862 = vpop.permute.xlu0 %861
      %v864 = vadd.f32 %v855, %v862
      %866 = vrot.lane.b32.xlu0 %v864, 98
      %v867 = vpop.permute.xlu0 %866
      %vm869 = vcmask 7168
      %870 = vst.msk [vmem:[%s5] sm:$0xff] %vm869, %v867
    $region33: #{_lambda_.1} parent=1 // pred_fallthru
      _
    // Predicated region
    $region34: #{_lambda_.1} parent=1 // pred_check
      _
    $region35: #{_lambda_.1} parent=1 // pred_check_branch
      %872 = sbr.rel (0) target = $region37
    $region36: #{_lambda_.1} parent=1 // pred_region
      _
    $region37: #{_lambda_.1} parent=1 // pred_fallthru
      _
    // Predicated region
    $region38: #{_lambda_.1} parent=1 // pred_check
      _
    $region39: #{_lambda_.1} parent=1 // pred_check_branch
      %874 = sbr.rel (0) target = $region41
    $region40: #{_lambda_.1} parent=1 // pred_region
      _
    $region41: #{_lambda_.1} parent=1 // pred_fallthru
      _
    %875 = vsyncpa [#allocation4], 1

</llo_original>
